<compile_context>
chip_gen: v6e
topology: v6e:2x2x1
jax: 0.10.0
libtpu: 0.0.40
codegen_flags: <defaults>
</compile_context>

<pallas_src>
import jax
import jax.numpy as jnp
import numpy as np
from jax import lax
from jax.experimental import pallas as pl
from jax.experimental.pallas import tpu as pltpu


# ----------------------------------------------------------------------------
# Stage 1: BN (folded affine) + ReLU + input projection for both directions.
# One matmul over a large row block; gi stored bf16 (f32 accumulation inside).
# ----------------------------------------------------------------------------
def _input_proj_kernel(x_ref, scale_ref, shift_ref, wih_ref, bih_ref, gi_ref):
    # x_ref: (rows, D) f32 ; wih_ref: (D, 6H) bf16 ; gi_ref: (rows, 6H) bf16
    y = jnp.maximum(x_ref[...] * scale_ref[...] + shift_ref[...], 0.0)
    gi = jnp.dot(y.astype(jnp.bfloat16), wih_ref[...],
                 preferred_element_type=jnp.float32) + bih_ref[...]
    gi_ref[...] = gi.astype(jnp.bfloat16)


# ----------------------------------------------------------------------------
# Stage 2: bidirectional GRU recurrence, both directions fused per grid step.
# grid = (T_pad // tc,); forward walks chunks 0..NT-1, backward NT-1..0.
# ----------------------------------------------------------------------------
def _bigru_recurrence_kernel(gif_ref, gib_ref, len_ref, whh_ref, bhh_ref,
                             outf_ref, outb_ref, hf_ref, hb_ref):
    t = pl.program_id(0)
    nt = pl.num_programs(0)
    tc = gif_ref.shape[0]                     # time steps in this chunk
    H = gif_ref.shape[2] // 3

    @pl.when(t == 0)                          # start of both chains
    def _():
        hf_ref[...] = jnp.zeros_like(hf_ref)
        hb_ref[...] = jnp.zeros_like(hb_ref)

    lens = len_ref[...]                       # (Bp, 1) int32 sequence lengths
    whh_f = whh_ref[0]                        # (H, 3H) bf16, VMEM resident
    whh_b = whh_ref[1]
    bhh_f = bhh_ref[0]                        # (1, 3H) f32
    bhh_b = bhh_ref[1]
    base_f = t * tc                           # abs. time of fwd chunk start
    base_b = (nt - 1 - t) * tc                # abs. time of bwd chunk start

    def gru_cell(gi, gh, h):
        r = jax.nn.sigmoid(gi[:, 0:H] + gh[:, 0:H])
        z = jax.nn.sigmoid(gi[:, H:2 * H] + gh[:, H:2 * H])
        n = jnp.tanh(gi[:, 2 * H:3 * H] + r * gh[:, 2 * H:3 * H])
        return (1.0 - z) * n + z * h

    def step(s, carry):
        h_f, h_b = carry
        # ---- forward chain: local step s ---------------------------------
        gh_f = jnp.dot(h_f.astype(jnp.bfloat16), whh_f,
                       preferred_element_type=jnp.float32) + bhh_f
        hn_f = gru_cell(gif_ref[s].astype(jnp.float32), gh_f, h_f)
        mask_f = (base_f + s) < lens          # pack_padded emulation (Bp, 1)
        hn_f = jnp.where(mask_f, hn_f, h_f)
        outf_ref[s] = jnp.where(mask_f, hn_f, 0.0)
        # ---- backward chain: local step tc-1-s (reverse time order) ------
        sb = tc - 1 - s
        gh_b = jnp.dot(h_b.astype(jnp.bfloat16), whh_b,
                       preferred_element_type=jnp.float32) + bhh_b
        hn_b = gru_cell(gib_ref[sb].astype(jnp.float32), gh_b, h_b)
        mask_b = (base_b + sb) < lens
        hn_b = jnp.where(mask_b, hn_b, h_b)
        outb_ref[sb] = jnp.where(mask_b, hn_b, 0.0)
        return hn_f, hn_b

    # Small unroll: steps are serially dependent; unroll=2 captures the
    # store/EUP overlap without blowing the vreg file at realistic H.
    h_f, h_b = lax.fori_loop(0, tc, step, (hf_ref[...], hb_ref[...]),
                             unroll=min(2, tc))
    hf_ref[...] = h_f
    hb_ref[...] = h_b


# ----------------------------------------------------------------------------
# Wrapper
# ----------------------------------------------------------------------------
def bn_relu_bigru(x_btd, lengths, params, *, time_chunk=64, stage1_rows=1024):
    """x_btd: (B, T, D) float; lengths: (B,) int. Returns (B, T, 2H) float32."""
    B, T, D = x_btd.shape
    H = params["w_hh_f"].shape[0]

    Bp = ((B + 7) // 8) * 8                   # fill vreg sublanes
    tc = min(time_chunk, T)                   # Stage-2 recurrence chunk
    T_pad = ((T + tc - 1) // tc) * tc
    NT = T_pad // tc

    # Stage-1 row block (decoupled from tc): largest divisor of T_pad whose
    # rows stay within the target block size.
    tc1 = 1
    for c in range(1, T_pad + 1):
        if T_pad % c == 0 and c * Bp <= max(stage1_rows, Bp):
            tc1 = c
    rows1 = tc1 * Bp
    NC1 = T_pad // tc1

    # ---- parameter glue (runs once, outside the kernels) --------------------
    eps = 1e-5
    scale_v = params["gamma"] / jnp.sqrt(params["running_var"] + eps)       # (D,)
    shift_v = params["beta"] - params["running_mean"] * scale_v             # (D,)
    scale = scale_v.reshape(1, D).astype(jnp.float32)
    shift = shift_v.reshape(1, D).astype(jnp.float32)
    w_ih = jnp.concatenate([params["w_ih_f"], params["w_ih_b"]],
                           axis=1).astype(jnp.bfloat16)                     # (D, 6H)
    b_ih = jnp.concatenate([params["b_ih_f"], params["b_ih_b"]],
                           axis=1).astype(jnp.float32)                      # (1, 6H)
    w_hh = jnp.stack([params["w_hh_f"], params["w_hh_b"]],
                     axis=0).astype(jnp.bfloat16)                           # (2, H, 3H)
    b_hh = jnp.stack([params["b_hh_f"], params["b_hh_b"]],
                     axis=0).astype(jnp.float32)                            # (2, 1, 3H)

    # ---- inputs: pad batch+time, time-major; keep x f32 into the BN ---------
    x = jnp.pad(x_btd.astype(jnp.float32),
                ((0, Bp - B), (0, T_pad - T), (0, 0)))
    x_flat = jnp.transpose(x, (1, 0, 2)).reshape(T_pad * Bp, D)             # (T*Bp, D)
    lens = jnp.pad(lengths.astype(jnp.int32), (0, Bp - B)).reshape(Bp, 1)

    sixH = 6 * H
    vmem_lim = 48 * 1024 * 1024               # headroom on v7x's 64 MiB per-TC VMEM

    # ---- Stage 1: large-block BN+ReLU+projection, bf16 gi output ------------
    gi_flat = pl.pallas_call(
        _input_proj_kernel,
        out_shape=jax.ShapeDtypeStruct((T_pad * Bp, sixH), jnp.bfloat16),
        grid=(NC1,),
        in_specs=[
            pl.BlockSpec((rows1, D), lambda c: (c, 0)),
            pl.BlockSpec((1, D), lambda c: (0, 0)),
            pl.BlockSpec((1, D), lambda c: (0, 0)),
            pl.BlockSpec((D, sixH), lambda c: (0, 0)),
            pl.BlockSpec((1, sixH), lambda c: (0, 0)),
        ],
        out_specs=pl.BlockSpec((rows1, sixH), lambda c: (c, 0)),
        compiler_params=pltpu.CompilerParams(
            dimension_semantics=("parallel",),
            vmem_limit_bytes=vmem_lim),
    )(x_flat, scale, shift, w_ih, b_ih)
    gi = gi_flat.reshape(T_pad, Bp, sixH)     # free reshape (row-major)

    # ---- Stage 2: fused-direction streamed recurrence ------------------------
    # gi is passed twice: fwd half (last-axis block 0) in natural chunk order,
    # bwd half (block 1) in reversed chunk order; outputs mirror that indexing.
    out_f, out_b = pl.pallas_call(
        _bigru_recurrence_kernel,
        out_shape=(jax.ShapeDtypeStruct((T_pad, Bp, H), jnp.float32),
                   jax.ShapeDtypeStruct((T_pad, Bp, H), jnp.float32)),
        grid=(NT,),
        in_specs=[
            pl.BlockSpec((tc, Bp, 3 * H), lambda t: (t, 0, 0)),
            pl.BlockSpec((tc, Bp, 3 * H), lambda t: (NT - 1 - t, 0, 1)),
            pl.BlockSpec((Bp, 1), lambda t: (0, 0)),
            pl.BlockSpec((2, H, 3 * H), lambda t: (0, 0, 0)),
            pl.BlockSpec((2, 1, 3 * H), lambda t: (0, 0, 0)),
        ],
        out_specs=(pl.BlockSpec((tc, Bp, H), lambda t: (t, 0, 0)),
                   pl.BlockSpec((tc, Bp, H), lambda t: (NT - 1 - t, 0, 0))),
        scratch_shapes=[pltpu.VMEM((Bp, H), jnp.float32),    # h forward
                        pltpu.VMEM((Bp, H), jnp.float32)],   # h backward
        compiler_params=pltpu.CompilerParams(
            dimension_semantics=("arbitrary",),
            vmem_limit_bytes=vmem_lim),
    )(gi, gi, lens, w_hh, b_hh)

    out = jnp.concatenate([out_f, out_b], axis=-1)           # (T_pad, Bp, 2H)
    # TODO(synk): this concat+transpose is one fused XLA copy pass over the
    # output; it could be removed with a batch-major in-kernel store (per-chunk
    # VMEM staging + swapaxes) at the cost of an in-kernel transpose.
    return jnp.transpose(out, (1, 0, 2))[:B, :T]


# ----------------------------------------------------------------------------
# Deterministic synthetic parameters (shapes match nn.BatchNorm1d + nn.GRU).
# ----------------------------------------------------------------------------
def init_params(key, D, H):
    ks = jax.random.split(key, 12)
    k = 1.0 / np.sqrt(H)
    u = lambda kk, shape: jax.random.uniform(kk, shape, jnp.float32, -k, k)
    return dict(
        gamma=jax.random.uniform(ks[0], (D,), jnp.float32, 0.5, 1.5),
        beta=jax.random.uniform(ks[1], (D,), jnp.float32, -0.5, 0.5),
        running_mean=jax.random.uniform(ks[2], (D,), jnp.float32, -0.5, 0.5),
        running_var=jax.random.uniform(ks[3], (D,), jnp.float32, 0.5, 1.5),
        # weights stored pre-transposed: (in_features, 3H), biases (1, 3H)
        w_ih_f=u(ks[4], (D, 3 * H)), w_hh_f=u(ks[5], (H, 3 * H)),
        b_ih_f=u(ks[6], (1, 3 * H)), b_hh_f=u(ks[7], (1, 3 * H)),
        w_ih_b=u(ks[8], (D, 3 * H)), w_hh_b=u(ks[9], (H, 3 * H)),
        b_ih_b=u(ks[10], (1, 3 * H)), b_hh_b=u(ks[11], (1, 3 * H)),
    )


# ----------------------------------------------------------------------------
# Pure-JAX f32 reference of the same semantics (for numerical checking).
# ----------------------------------------------------------------------------
def reference(x_btd, lengths, params):
    B, T, D = x_btd.shape
    H = params["w_ih_f"].shape[1] // 3
    eps = 1e-5
    scale = params["gamma"] / jnp.sqrt(params["running_var"] + eps)
    shift = params["beta"] - params["running_mean"] * scale
    xn = jnp.maximum(x_btd * scale + shift, 0.0)
    lens = lengths.reshape(B, 1)

    def step(x_t, h, w_ih, w_hh, b_ih, b_hh):
        gi = x_t @ w_ih + b_ih
        gh = h @ w_hh + b_hh
        r = jax.nn.sigmoid(gi[:, :H] + gh[:, :H])
        z = jax.nn.sigmoid(gi[:, H:2 * H] + gh[:, H:2 * H])
        n = jnp.tanh(gi[:, 2 * H:] + r * gh[:, 2 * H:])
        return (1.0 - z) * n + z * h

    out_f = []
    h = jnp.zeros((B, H), jnp.float32)
    for t in range(T):
        hn = step(xn[:, t], h, params["w_ih_f"], params["w_hh_f"],
                  params["b_ih_f"], params["b_hh_f"])
        m = t < lens
        h = jnp.where(m, hn, h)
        out_f.append(jnp.where(m, hn, 0.0))
    out_f = jnp.stack(out_f, axis=1)

    out_b = [None] * T
    h = jnp.zeros((B, H), jnp.float32)
    for t in range(T - 1, -1, -1):
        hn = step(xn[:, t], h, params["w_ih_b"], params["w_hh_b"],
                  params["b_ih_b"], params["b_hh_b"])
        m = t < lens
        h = jnp.where(m, hn, h)
        out_b[t] = jnp.where(m, hn, 0.0)
    out_b = jnp.stack(out_b, axis=1)
    return jnp.concatenate([out_f, out_b], axis=-1)


if __name__ == "__main__":
    B, T, D, H = 4, 8, 64, 128   # small shapes: batch=4, seq=8, input=64, hidden=128
    key = jax.random.PRNGKey(0)
    kx, kp = jax.random.split(key)
    x = jax.random.normal(kx, (B, T, D), jnp.float32)
    input_lengths = jnp.array([8, 6, 3, 5], jnp.int32)
    params = init_params(kp, D, H)

    out = bn_relu_bigru(x, input_lengths, params)
    out = jax.block_until_ready(out)
    assert out.shape == (B, T, 2 * H)

    ref = reference(x, input_lengths, params)
    # Tolerance accounts for the bf16 input projection, bf16-stored gi and the
    # bf16-operand recurrent matmul (all with f32 accumulation).
    np.testing.assert_allclose(np.asarray(out), np.asarray(ref),
                               rtol=3e-2, atol=3e-2)
    print("KERNEL_OK")
</pallas_src>

<mosaic_0001>
module attributes {stable_mosaic.version = 11 : i64} {
  func.func @_input_proj_kernel(%arg0: i32, %arg1: memref<64x64xf32, #tpu.memory_space<vmem>>, %arg2: memref<1x64xf32, #tpu.memory_space<vmem>>, %arg3: memref<1x64xf32, #tpu.memory_space<vmem>>, %arg4: memref<64x768xbf16, #tpu.memory_space<vmem>>, %arg5: memref<1x768xf32, #tpu.memory_space<vmem>>, %arg6: memref<64x768xbf16, #tpu.memory_space<vmem>>) attributes {dimension_semantics = [#tpu.dimension_semantics<parallel>], iteration_bounds = array<i64: 1>, scalar_prefetch = 0 : i64, scratch_operands = 0 : i64, tpu.core_type = #tpu.core_type<tc>, window_params = [{transform_indices = @transform_0, window_bounds = array<i64: 64, 64>}, {pipeline_mode = #tpu.pipeline_mode<synchronous>, transform_indices = @transform_1, window_bounds = array<i64: 1, 64>}, {pipeline_mode = #tpu.pipeline_mode<synchronous>, transform_indices = @transform_2, window_bounds = array<i64: 1, 64>}, {pipeline_mode = #tpu.pipeline_mode<synchronous>, transform_indices = @transform_3, window_bounds = array<i64: 64, 768>}, {pipeline_mode = #tpu.pipeline_mode<synchronous>, transform_indices = @transform_4, window_bounds = array<i64: 1, 768>}, {transform_indices = @transform_5, window_bounds = array<i64: 64, 768>}]} {
    %c0 = arith.constant 0 : index
    %c0_0 = arith.constant 0 : index
    %0 = vector.load %arg1[%c0, %c0_0] : memref<64x64xf32, #tpu.memory_space<vmem>>, vector<64x64xf32>
    %c0_1 = arith.constant 0 : index
    %c0_2 = arith.constant 0 : index
    %1 = vector.load %arg2[%c0_1, %c0_2] : memref<1x64xf32, #tpu.memory_space<vmem>>, vector<1x64xf32>
    %2 = vector.broadcast %1 : vector<1x64xf32> to vector<64x64xf32>
    %3 = arith.mulf %0, %2 : vector<64x64xf32>
    %c0_3 = arith.constant 0 : index
    %c0_4 = arith.constant 0 : index
    %4 = vector.load %arg3[%c0_3, %c0_4] : memref<1x64xf32, #tpu.memory_space<vmem>>, vector<1x64xf32>
    %5 = vector.broadcast %4 : vector<1x64xf32> to vector<64x64xf32>
    %6 = arith.addf %3, %5 : vector<64x64xf32>
    %cst = arith.constant 0.000000e+00 : f32
    %7 = vector.broadcast %cst : f32 to vector<64x64xf32>
    %8 = arith.maximumf %6, %7 : vector<64x64xf32>
    %9 = arith.truncf %8 : vector<64x64xf32> to vector<64x64xbf16>
    %c0_5 = arith.constant 0 : index
    %c0_6 = arith.constant 0 : index
    %10 = vector.load %arg4[%c0_5, %c0_6] : memref<64x768xbf16, #tpu.memory_space<vmem>>, vector<64x768xbf16>
    %cst_7 = arith.constant dense<0.000000e+00> : vector<64x768xf32>
    %11 = tpu.matmul %9, %10, %cst_7 {dimension_numbers = #tpu.dot_dimension_numbers<[1], [0], [0], [1], [0, 0, 1, 1], [], []>} : vector<64x64xbf16>, vector<64x768xbf16>, vector<64x768xf32> -> vector<64x768xf32>
    %c0_8 = arith.constant 0 : index
    %c0_9 = arith.constant 0 : index
    %12 = vector.load %arg5[%c0_8, %c0_9] : memref<1x768xf32, #tpu.memory_space<vmem>>, vector<1x768xf32>
    %13 = vector.broadcast %12 : vector<1x768xf32> to vector<64x768xf32>
    %14 = arith.addf %11, %13 : vector<64x768xf32>
    %15 = arith.truncf %14 : vector<64x768xf32> to vector<64x768xbf16>
    %c0_10 = arith.constant 0 : index
    %c0_11 = arith.constant 0 : index
    %16 = vector.load %arg6[%c0_10, %c0_11] : memref<64x768xbf16, #tpu.memory_space<vmem>>, vector<64x768xbf16>
    tpu.vector_store %arg6[%c0_10, %c0_11], %15 {strides = array<i32>} : memref<64x768xbf16, #tpu.memory_space<vmem>>, vector<64x768xbf16>,
    return
  }
  func.func @transform_0(%arg0: i32) -> (i32, i32) {
    %c0_i32 = arith.constant 0 : i32
    %c0_i32_0 = arith.constant 0 : i32
    return %arg0, %c0_i32 : i32, i32
  }
  func.func @transform_1(%arg0: i32) -> (i32, i32) {
    %c0_i32 = arith.constant 0 : i32
    %c0_i32_0 = arith.constant 0 : i32
    %c0_i32_1 = arith.constant 0 : i32
    return %c0_i32, %c0_i32_0 : i32, i32
  }
  func.func @transform_2(%arg0: i32) -> (i32, i32) {
    %c0_i32 = arith.constant 0 : i32
    %c0_i32_0 = arith.constant 0 : i32
    %c0_i32_1 = arith.constant 0 : i32
    return %c0_i32, %c0_i32_0 : i32, i32
  }
  func.func @transform_3(%arg0: i32) -> (i32, i32) {
    %c0_i32 = arith.constant 0 : i32
    %c0_i32_0 = arith.constant 0 : i32
    %c0_i32_1 = arith.constant 0 : i32
    return %c0_i32, %c0_i32_0 : i32, i32
  }
  func.func @transform_4(%arg0: i32) -> (i32, i32) {
    %c0_i32 = arith.constant 0 : i32
    %c0_i32_0 = arith.constant 0 : i32
    %c0_i32_1 = arith.constant 0 : i32
    return %c0_i32, %c0_i32_0 : i32, i32
  }
  func.func @transform_5(%arg0: i32) -> (i32, i32) {
    %c0_i32 = arith.constant 0 : i32
    %c0_i32_0 = arith.constant 0 : i32
    return %arg0, %c0_i32 : i32, i32
  }
}

</mosaic_0001>

<llo_original>
// kernel: tpu_custom_call.1
$region0: #{tpu_custom_call.1}
  #allocation0 [shape = 'u32[]', space=smem, size = 0x4, offset = 0x4, fixed_abs, tag = 'smem constant byte address 0x4 - core index']
  #allocation1 [shape = 'u32[144,128]{1,0:T(1,128)}', space=vmem, size = 0x12000, scoped, tag = 'internal scratch']
  %s0 = inlined_call_operand.hbm [shape: f32[64,64], index: 0, kind: input, shape index: {}]
  %s1 = inlined_call_operand.vmem [shape: f32[1,64], index: 1, kind: input, shape index: {}]
  %s2 = inlined_call_operand.hbm [shape: f32[1,64], index: 2, kind: input, shape index: {}]
  %s3 = inlined_call_operand.hbm [shape: bf16[64,768], index: 3, kind: input, shape index: {}]
  %s4 = inlined_call_operand.vmem [shape: f32[1,768], index: 4, kind: input, shape index: {}]
  %s5 = inlined_call_operand.hbm [shape: bf16[64,768], index: 5, kind: output, shape index: {}]
  %s6 = sld [smem:[#allocation0]]
  $region42: #{tpu_custom_call.1} parent=0
    _
  %s8 = ssub.s32 1, %s6
  %s9 = scalar_select 0, %s8, %s6
  $region1: #{tpu_custom_call.1} parent=0
    #allocation2 [shape = 'u8[32768]{0}', space=vmem, size = 0x8000, scoped, tag = 'input window, operand 0, single buffered']
    #allocation3 [shape = 's32[1]{0}', space=sflag, size = 0x4, scoped, tag = 'scoped memory for tpu_custom_call.1']
    #allocation4 [shape = 's32[1]{0}', space=sflag, size = 0x4, scoped, tag = 'scoped memory for tpu_custom_call.1']
    #allocation5 [shape = 'u8[512]{0}', space=vmem, size = 0x400, scoped, tag = 'input window, operand 2, single buffered']
    #allocation6 [shape = 's32[1]{0}', space=sflag, size = 0x4, scoped, tag = 'scoped memory for tpu_custom_call.1']
    #allocation7 [shape = 'u8[98304]{0}', space=vmem, size = 0x18000, scoped, tag = 'input window, operand 3, single buffered']
    #allocation8 [shape = 'u8[98304]{0}', space=vmem, size = 0x18000, scoped, tag = 'output window, operand 0, single buffered']
    %10 = vsyncpa [#allocation3], 0
    %11 = vsyncpa [#allocation6], 0
    %12 = vsyncpa [#allocation4], 0
    // Predicated region
    $region2: #{tpu_custom_call.1} parent=1 // pred_check
      _
    $region3: #{tpu_custom_call.1} parent=1 // pred_check_branch
      %14 = sbr.rel (0) target = $region5
    $region4: #{tpu_custom_call.1} parent=1 // pred_region
      %s16 = ssub.s32 1024, 1024
      %17 = vsyncadd [#allocation3], %s16
      %s18 = sshll.u32 [#allocation2], 4
      %s19 = int_to_ptr.vmem [resolvable:$true] %s18
      %24 = dma.hbm_to_vmem [thread:$0]  %s0, 1024, %s19, [#allocation3], 128, 128, 8
    $region5: #{tpu_custom_call.1} parent=1 // pred_fallthru
      _
    // Predicated region
    $region6: #{tpu_custom_call.1} parent=1 // pred_check
      _
    $region7: #{tpu_custom_call.1} parent=1 // pred_check_branch
      %26 = sbr.rel (0) target = $region9
    $region8: #{tpu_custom_call.1} parent=1 // pred_region
      _
    $region9: #{tpu_custom_call.1} parent=1 // pred_fallthru
      _
    // Predicated region
    $region10: #{tpu_custom_call.1} parent=1 // pred_check
      _
    $region11: #{tpu_custom_call.1} parent=1 // pred_check_branch
      %28 = sbr.rel (0) target = $region13
    $region12: #{tpu_custom_call.1} parent=1 // pred_region
      %s30 = ssub.s32 16, 16
      %31 = vsyncadd [#allocation6], %s30
      %s33 = sshll.u32 [#allocation5], 4
      %s34 = int_to_ptr.vmem [resolvable:$true] %s33
      %36 = dma.hbm_to_vmem [thread:$0]  %s2, 16, %s34, [#allocation6]
    $region13: #{tpu_custom_call.1} parent=1 // pred_fallthru
      _
    // Predicated region
    $region14: #{tpu_custom_call.1} parent=1 // pred_check
      _
    $region15: #{tpu_custom_call.1} parent=1 // pred_check_branch
      %38 = sbr.rel (0) target = $region17
    $region16: #{tpu_custom_call.1} parent=1 // pred_region
      %s40 = ssub.s32 3072, 3072
      %41 = vsyncadd [#allocation6], %s40
      %s42 = sshll.u32 [#allocation7], 4
      %s43 = int_to_ptr.vmem [resolvable:$true] %s42
      %48 = dma.hbm_to_vmem [thread:$0]  %s3, 3072, %s43, [#allocation6], 384, 384, 24
    $region17: #{tpu_custom_call.1} parent=1 // pred_fallthru
      _
    // Predicated region
    $region18: #{tpu_custom_call.1} parent=1 // pred_check
      _
    $region19: #{tpu_custom_call.1} parent=1 // pred_check_branch
      %50 = sbr.rel (0) target = $region21
    $region20: #{tpu_custom_call.1} parent=1 // pred_region
      _
    $region21: #{tpu_custom_call.1} parent=1 // pred_fallthru
      _
    // Predicated region
    $region22: #{tpu_custom_call.1} parent=1 // pred_check
      _
    $region23: #{tpu_custom_call.1} parent=1 // pred_check_branch
      %52 = sbr.rel (0) target = $region25
    $region24: #{tpu_custom_call.1} parent=1 // pred_region
      %53 = dma.done [#allocation3], 1024
    $region25: #{tpu_custom_call.1} parent=1 // pred_fallthru
      _
    // Predicated region
    $region26: #{tpu_custom_call.1} parent=1 // pred_check
      _
    $region27: #{tpu_custom_call.1} parent=1 // pred_check_branch
      %55 = sbr.rel (0) target = $region29
    $region28: #{tpu_custom_call.1} parent=1 // pred_region
      %56 = dma.done [#allocation6], 16
    $region29: #{tpu_custom_call.1} parent=1 // pred_fallthru
      _
    // Predicated region
    $region30: #{tpu_custom_call.1} parent=1 // pred_check
      _
    $region31: #{tpu_custom_call.1} parent=1 // pred_check_branch
      %58 = sbr.rel (0) target = $region33
    $region32: #{tpu_custom_call.1} parent=1 // pred_region
      %59 = dma.done [#allocation6], 3072
    $region33: #{tpu_custom_call.1} parent=1 // pred_fallthru
      _
    %v61 = vld [vmem:[#allocation2] sm:$0xff]
    %v62 = vld [vmem:[#allocation2 + $0x8] sm:$0xff]
    %v63 = vld [vmem:[#allocation2 + $0x10] sm:$0xff]
    %v64 = vld [vmem:[#allocation2 + $0x18] sm:$0xff]
    %v65 = vld [vmem:[#allocation2 + $0x20] sm:$0xff]
    %v66 = vld [vmem:[#allocation2 + $0x28] sm:$0xff]
    %v67 = vld [vmem:[#allocation2 + $0x30] sm:$0xff]
    %v68 = vld [vmem:[#allocation2 + $0x38] sm:$0xff]
    %v69 = vld [vmem:[%s1] sm:$0x1]
    %v71 = vlaneseq
    %v72 = vshrl.u32 %v71, 7
    %v73 = vsub.s32 0, %v72
    %v74 = vrot.slane %v69, %v73
    %v76 = vmul.f32 %v61, %v74
    %v77 = vmul.f32 %v62, %v74
    %v78 = vmul.f32 %v63, %v74
    %v79 = vmul.f32 %v64, %v74
    %v80 = vmul.f32 %v65, %v74
    %v81 = vmul.f32 %v66, %v74
    %v82 = vmul.f32 %v67, %v74
    %v83 = vmul.f32 %v68, %v74
    %v84 = vld [vmem:[#allocation5] sm:$0x1]
    %v86 = vlaneseq
    %v87 = vshrl.u32 %v86, 7
    %v88 = vsub.s32 0, %v87
    %v89 = vrot.slane %v84, %v88
    %v91 = vadd.f32 %v76, %v89
    %v92 = vadd.f32 %v77, %v89
    %v93 = vadd.f32 %v78, %v89
    %v94 = vadd.f32 %v79, %v89
    %v95 = vadd.f32 %v80, %v89
    %v96 = vadd.f32 %v81, %v89
    %v97 = vadd.f32 %v82, %v89
    %v98 = vadd.f32 %v83, %v89
    %v99 = vmax.f32 %v91, 0.0
    %v100 = vmax.f32 %v92, 0.0
    %v101 = vmax.f32 %v93, 0.0
    %v102 = vmax.f32 %v94, 0.0
    %v103 = vmax.f32 %v95, 0.0
    %v104 = vmax.f32 %v96, 0.0
    %v105 = vmax.f32 %v97, 0.0
    %v106 = vmax.f32 %v98, 0.0
    %v107 = vpack.c.bf16 %v100, %v99
    %v108 = vpack.c.bf16 %v102, %v101
    %v109 = vpack.c.bf16 %v104, %v103
    %v110 = vpack.c.bf16 %v106, %v105
    %v111 = vld [vmem:[#allocation7] sm:$0xff]
    %v112 = vld [vmem:[#allocation7 + $0x8] sm:$0xff]
    %v113 = vld [vmem:[#allocation7 + $0x10] sm:$0xff]
    %v114 = vld [vmem:[#allocation7 + $0x18] sm:$0xff]
    %v115 = vld [vmem:[#allocation7 + $0x20] sm:$0xff]
    %v116 = vld [vmem:[#allocation7 + $0x28] sm:$0xff]
    %v117 = vld [vmem:[#allocation7 + $0x30] sm:$0xff]
    %v118 = vld [vmem:[#allocation7 + $0x38] sm:$0xff]
    %v119 = vld [vmem:[#allocation7 + $0x40] sm:$0xff]
    %v120 = vld [vmem:[#allocation7 + $0x48] sm:$0xff]
    %v121 = vld [vmem:[#allocation7 + $0x50] sm:$0xff]
    %v122 = vld [vmem:[#allocation7 + $0x58] sm:$0xff]
    %v123 = vld [vmem:[#allocation7 + $0x60] sm:$0xff]
    %v124 = vld [vmem:[#allocation7 + $0x68] sm:$0xff]
    %v125 = vld [vmem:[#allocation7 + $0x70] sm:$0xff]
    %v126 = vld [vmem:[#allocation7 + $0x78] sm:$0xff]
    %v127 = vld [vmem:[#allocation7 + $0x80] sm:$0xff]
    %v128 = vld [vmem:[#allocation7 + $0x88] sm:$0xff]
    %v129 = vld [vmem:[#allocation7 + $0x90] sm:$0xff]
    %v130 = vld [vmem:[#allocation7 + $0x98] sm:$0xff]
    %v131 = vld [vmem:[#allocation7 + $0xa0] sm:$0xff]
    %v132 = vld [vmem:[#allocation7 + $0xa8] sm:$0xff]
    %v133 = vld [vmem:[#allocation7 + $0xb0] sm:$0xff]
    %v134 = vld [vmem:[#allocation7 + $0xb8] sm:$0xff]
    %v135 = vld [vmem:[%s4] sm:$0x3f]
    %v137 = vlaneseq
    %v138 = vshrl.u32 %v137, 7
    %v139 = vsub.s32 0, %v138
    %v140 = vrot.slane %v135, %v139
    %v141 = vlaneseq
    %v142 = vshrl.u32 %v141, 7
    %v143 = vsub.s32 1, %v142
    %v144 = vrot.slane %v135, %v143
    %v145 = vlaneseq
    %v146 = vshrl.u32 %v145, 7
    %v147 = vsub.s32 2, %v146
    %v148 = vrot.slane %v135, %v147
    %v149 = vlaneseq
    %v150 = vshrl.u32 %v149, 7
    %v151 = vsub.s32 3, %v150
    %v152 = vrot.slane %v135, %v151
    %v153 = vlaneseq
    %v154 = vshrl.u32 %v153, 7
    %v155 = vsub.s32 4, %v154
    %v156 = vrot.slane %v135, %v155
    %v157 = vlaneseq
    %v158 = vshrl.u32 %v157, 7
    %v159 = vsub.s32 5, %v158
    %v160 = vrot.slane %v135, %v159
    %v191 = vunpack.c.l.b16 %v111
    %v192 = vunpack.c.h.b16 %v111
    %v193 = vunpack.c.l.b16 %v112
    %v194 = vunpack.c.h.b16 %v112
    %v195 = vunpack.c.l.b16 %v113
    %v196 = vunpack.c.h.b16 %v113
    %v197 = vunpack.c.l.b16 %v114
    %v198 = vunpack.c.h.b16 %v114
    %v199 = vunpack.c.l.b16 %v115
    %v200 = vunpack.c.h.b16 %v115
    %v201 = vunpack.c.l.b16 %v116
    %v202 = vunpack.c.h.b16 %v116
    %v203 = vunpack.c.l.b16 %v117
    %v204 = vunpack.c.h.b16 %v117
    %v205 = vunpack.c.l.b16 %v118
    %v206 = vunpack.c.h.b16 %v118
    %v207 = vunpack.c.l.b16 %v119
    %v208 = vunpack.c.h.b16 %v119
    %v209 = vunpack.c.l.b16 %v120
    %v210 = vunpack.c.h.b16 %v120
    %v211 = vunpack.c.l.b16 %v121
    %v212 = vunpack.c.h.b16 %v121
    %v213 = vunpack.c.l.b16 %v122
    %v214 = vunpack.c.h.b16 %v122
    %v215 = vunpack.c.l.b16 %v123
    %v216 = vunpack.c.h.b16 %v123
    %v217 = vunpack.c.l.b16 %v124
    %v218 = vunpack.c.h.b16 %v124
    %v219 = vunpack.c.l.b16 %v125
    %v220 = vunpack.c.h.b16 %v125
    %v221 = vunpack.c.l.b16 %v126
    %v222 = vunpack.c.h.b16 %v126
    %v223 = vunpack.c.l.b16 %v127
    %v224 = vunpack.c.h.b16 %v127
    %v225 = vunpack.c.l.b16 %v128
    %v226 = vunpack.c.h.b16 %v128
    %v227 = vunpack.c.l.b16 %v129
    %v228 = vunpack.c.h.b16 %v129
    %v229 = vunpack.c.l.b16 %v130
    %v230 = vunpack.c.h.b16 %v130
    %v231 = vunpack.c.l.b16 %v131
    %v232 = vunpack.c.h.b16 %v131
    %v233 = vunpack.c.l.b16 %v132
    %v234 = vunpack.c.h.b16 %v132
    %v235 = vunpack.c.l.b16 %v133
    %v236 = vunpack.c.h.b16 %v133
    %v237 = vunpack.c.l.b16 %v134
    %v238 = vunpack.c.h.b16 %v134
    %v239 = vpack.c.b16 %v197, %v191
    %v240 = vpack.c.b16 %v198, %v192
    %v241 = vpack.c.b16 %v199, %v193
    %v242 = vpack.c.b16 %v200, %v194
    %v243 = vpack.c.b16 %v201, %v195
    %v244 = vpack.c.b16 %v202, %v196
    %v245 = vpack.c.b16 %v209, %v203
    %v246 = vpack.c.b16 %v210, %v204
    %v247 = vpack.c.b16 %v211, %v205
    %v248 = vpack.c.b16 %v212, %v206
    %v249 = vpack.c.b16 %v213, %v207
    %v250 = vpack.c.b16 %v214, %v208
    %v251 = vpack.c.b16 %v221, %v215
    %v252 = vpack.c.b16 %v222, %v216
    %v253 = vpack.c.b16 %v223, %v217
    %v254 = vpack.c.b16 %v224, %v218
    %v255 = vpack.c.b16 %v225, %v219
    %v256 = vpack.c.b16 %v226, %v220
    %v257 = vpack.c.b16 %v233, %v227
    %v258 = vpack.c.b16 %v234, %v228
    %v259 = vpack.c.b16 %v235, %v229
    %v260 = vpack.c.b16 %v236, %v230
    %v261 = vpack.c.b16 %v237, %v231
    %v262 = vpack.c.b16 %v238, %v232
    %vm287 = vcmask 523264
    %v289 = vsel %vm287, %v107, 0
    %v292 = vsel %vm287, %v108, 0
    %v295 = vsel %vm287, %v109, 0
    %v298 = vsel %vm287, %v110, 0
    %300 = vmatprep.subr.bf16.mxu0 0
    %301 = vmatpush1.bf16.msra.mxu0 0
    %302 = vmatprep.subr.bf16.mxu0 0
    %303 = vmatpush1.bf16.msra.mxu0 0
    %304 = vmatprep.subr.bf16.mxu0 0
    %305 = vmatpush1.bf16.msra.mxu0 0
    %306 = vmatprep.subr.bf16.mxu0 0
    %307 = vmatpush1.bf16.msra.mxu0 0
    %308 = vmatprep.subr.bf16.mxu0 %v258
    %309 = vmatpush1.bf16.msra.mxu0 %v257
    %310 = vmatprep.subr.bf16.mxu0 %v252
    %311 = vmatpush1.bf16.msra.mxu0 %v251
    %312 = vmatprep.subr.bf16.mxu0 %v246
    %313 = vmatpush1.bf16.msra.mxu0 %v245
    %314 = vmatprep.subr.bf16.mxu0 %v240
    %315 = vmatpush1.bf16.msra.mxu0 %v239
    %316 = vmatprep.subr.bf16.mxu0 0
    %317 = vmatpush2.bf16.msra.mxu0 0
    %318 = vmatprep.subr.bf16.mxu0 0
    %319 = vmatpush2.bf16.msra.mxu0 0
    %320 = vmatprep.subr.bf16.mxu0 0
    %321 = vmatpush2.bf16.msra.mxu0 0
    %322 = vmatprep.subr.bf16.mxu0 0
    %323 = vmatpush2.bf16.msra.mxu0 0
    %324 = vmatprep.subr.bf16.mxu0 0
    %325 = vmatpush2.bf16.msra.mxu0 0
    %326 = vmatprep.subr.bf16.mxu0 0
    %327 = vmatpush2.bf16.msra.mxu0 0
    %328 = vmatprep.subr.bf16.mxu0 0
    %329 = vmatpush2.bf16.msra.mxu0 0
    %330 = vmatprep.subr.bf16.mxu0 0
    %331 = vmatpush2.bf16.msra.mxu0 0
    %332 = vmatprep.mubr.bf16.mxu0 0
    %333 = vmatmul.mubr.bf16.gmra.mxu0 %v289
    %v334 = vpop.f32.mrf.mxu0
    %v335 = vadd.f32 %v140, %v334
    %v336 = vpop.f32.mrf.mxu0
    %v337 = vadd.f32 %v144, %v336
    %v338 = vpop.f32.mrf.mxu0
    %v339 = vadd.f32 %v140, %v338
    %v340 = vpop.f32.mrf.mxu0
    %v341 = vadd.f32 %v144, %v340
    %342 = vmatprep.mubr.bf16.mxu0 0
    %343 = vmatmul.mubr.bf16.gmra.mxu0 %v292
    %v344 = vpop.f32.mrf.mxu0
    %v345 = vadd.f32 %v140, %v344
    %v346 = vpop.f32.mrf.mxu0
    %v347 = vadd.f32 %v144, %v346
    %v348 = vpop.f32.mrf.mxu0
    %v349 = vadd.f32 %v140, %v348
    %v350 = vpop.f32.mrf.mxu0
    %v351 = vadd.f32 %v144, %v350
    %352 = vmatprep.mubr.bf16.mxu0 0
    %353 = vmatmul.mubr.bf16.gmra.mxu0 %v295
    %v354 = vpop.f32.mrf.mxu0
    %v355 = vadd.f32 %v140, %v354
    %v356 = vpop.f32.mrf.mxu0
    %v357 = vadd.f32 %v144, %v356
    %v358 = vpop.f32.mrf.mxu0
    %v359 = vadd.f32 %v140, %v358
    %v360 = vpop.f32.mrf.mxu0
    %v361 = vadd.f32 %v144, %v360
    %362 = vmatprep.mubr.bf16.mxu0 0
    %363 = vmatmul.mubr.bf16.gmra.mxu0 %v298
    %v364 = vpop.f32.mrf.mxu0
    %v365 = vadd.f32 %v140, %v364
    %v366 = vpop.f32.mrf.mxu0
    %v367 = vadd.f32 %v144, %v366
    %v368 = vpop.f32.mrf.mxu0
    %v369 = vadd.f32 %v140, %v368
    %v370 = vpop.f32.mrf.mxu0
    %v371 = vadd.f32 %v144, %v370
    %372 = vdwg.mxu0
    %373 = vmatprep.subr.bf16.mxu0 0
    %374 = vmatpush1.bf16.msra.mxu0 0
    %375 = vmatprep.subr.bf16.mxu0 0
    %376 = vmatpush1.bf16.msra.mxu0 0
    %377 = vmatprep.subr.bf16.mxu0 0
    %378 = vmatpush1.bf16.msra.mxu0 0
    %379 = vmatprep.subr.bf16.mxu0 0
    %380 = vmatpush1.bf16.msra.mxu0 0
    %381 = vmatprep.subr.bf16.mxu0 %v260
    %382 = vmatpush1.bf16.msra.mxu0 %v259
    %383 = vmatprep.subr.bf16.mxu0 %v254
    %384 = vmatpush1.bf16.msra.mxu0 %v253
    %385 = vmatprep.subr.bf16.mxu0 %v248
    %386 = vmatpush1.bf16.msra.mxu0 %v247
    %387 = vmatprep.subr.bf16.mxu0 %v242
    %388 = vmatpush1.bf16.msra.mxu0 %v241
    %389 = vmatprep.subr.bf16.mxu0 0
    %390 = vmatpush2.bf16.msra.mxu0 0
    %391 = vmatprep.subr.bf16.mxu0 0
    %392 = vmatpush2.bf16.msra.mxu0 0
    %393 = vmatprep.subr.bf16.mxu0 0
    %394 = vmatpush2.bf16.msra.mxu0 0
    %395 = vmatprep.subr.bf16.mxu0 0
    %396 = vmatpush2.bf16.msra.mxu0 0
    %397 = vmatprep.subr.bf16.mxu0 0
    %398 = vmatpush2.bf16.msra.mxu0 0
    %399 = vmatprep.subr.bf16.mxu0 0
    %400 = vmatpush2.bf16.msra.mxu0 0
    %401 = vmatprep.subr.bf16.mxu0 0
    %402 = vmatpush2.bf16.msra.mxu0 0
    %403 = vmatprep.subr.bf16.mxu0 0
    %404 = vmatpush2.bf16.msra.mxu0 0
    %405 = vmatprep.mubr.bf16.mxu0 0
    %406 = vmatmul.mubr.bf16.gmra.mxu0 %v289
    %v407 = vpop.f32.mrf.mxu0
    %v408 = vadd.f32 %v148, %v407
    %v409 = vpop.f32.mrf.mxu0
    %v410 = vadd.f32 %v152, %v409
    %v411 = vpop.f32.mrf.mxu0
    %v412 = vadd.f32 %v148, %v411
    %v413 = vpop.f32.mrf.mxu0
    %v414 = vadd.f32 %v152, %v413
    %415 = vmatprep.mubr.bf16.mxu0 0
    %416 = vmatmul.mubr.bf16.gmra.mxu0 %v292
    %v417 = vpop.f32.mrf.mxu0
    %v418 = vadd.f32 %v148, %v417
    %v419 = vpop.f32.mrf.mxu0
    %v420 = vadd.f32 %v152, %v419
    %v421 = vpop.f32.mrf.mxu0
    %v422 = vadd.f32 %v148, %v421
    %v423 = vpop.f32.mrf.mxu0
    %v424 = vadd.f32 %v152, %v423
    %425 = vmatprep.mubr.bf16.mxu0 0
    %426 = vmatmul.mubr.bf16.gmra.mxu0 %v295
    %v427 = vpop.f32.mrf.mxu0
    %v428 = vadd.f32 %v148, %v427
    %v429 = vpop.f32.mrf.mxu0
    %v430 = vadd.f32 %v152, %v429
    %v431 = vpop.f32.mrf.mxu0
    %v432 = vadd.f32 %v148, %v431
    %v433 = vpop.f32.mrf.mxu0
    %v434 = vadd.f32 %v152, %v433
    %435 = vmatprep.mubr.bf16.mxu0 0
    %436 = vmatmul.mubr.bf16.gmra.mxu0 %v298
    %v437 = vpop.f32.mrf.mxu0
    %v438 = vadd.f32 %v148, %v437
    %v439 = vpop.f32.mrf.mxu0
    %v440 = vadd.f32 %v152, %v439
    %v441 = vpop.f32.mrf.mxu0
    %v442 = vadd.f32 %v148, %v441
    %v443 = vpop.f32.mrf.mxu0
    %v444 = vadd.f32 %v152, %v443
    %445 = vdwg.mxu0
    %446 = vmatprep.subr.bf16.mxu0 0
    %447 = vmatpush1.bf16.msra.mxu0 0
    %448 = vmatprep.subr.bf16.mxu0 0
    %449 = vmatpush1.bf16.msra.mxu0 0
    %450 = vmatprep.subr.bf16.mxu0 0
    %451 = vmatpush1.bf16.msra.mxu0 0
    %452 = vmatprep.subr.bf16.mxu0 0
    %453 = vmatpush1.bf16.msra.mxu0 0
    %454 = vmatprep.subr.bf16.mxu0 %v262
    %455 = vmatpush1.bf16.msra.mxu0 %v261
    %456 = vmatprep.subr.bf16.mxu0 %v256
    %457 = vmatpush1.bf16.msra.mxu0 %v255
    %458 = vmatprep.subr.bf16.mxu0 %v250
    %459 = vmatpush1.bf16.msra.mxu0 %v249
    %460 = vmatprep.subr.bf16.mxu0 %v244
    %461 = vmatpush1.bf16.msra.mxu0 %v243
    %462 = vmatprep.subr.bf16.mxu0 0
    %463 = vmatpush2.bf16.msra.mxu0 0
    %464 = vmatprep.subr.bf16.mxu0 0
    %465 = vmatpush2.bf16.msra.mxu0 0
    %466 = vmatprep.subr.bf16.mxu0 0
    %467 = vmatpush2.bf16.msra.mxu0 0
    %468 = vmatprep.subr.bf16.mxu0 0
    %469 = vmatpush2.bf16.msra.mxu0 0
    %470 = vmatprep.subr.bf16.mxu0 0
    %471 = vmatpush2.bf16.msra.mxu0 0
    %472 = vmatprep.subr.bf16.mxu0 0
    %473 = vmatpush2.bf16.msra.mxu0 0
    %474 = vmatprep.subr.bf16.mxu0 0
    %475 = vmatpush2.bf16.msra.mxu0 0
    %476 = vmatprep.subr.bf16.mxu0 0
    %477 = vmatpush2.bf16.msra.mxu0 0
    %478 = vmatprep.mubr.bf16.mxu0 0
    %479 = vmatmul.mubr.bf16.gmra.mxu0 %v289
    %v480 = vpop.f32.mrf.mxu0
    %v481 = vadd.f32 %v156, %v480
    %v482 = vpop.f32.mrf.mxu0
    %v483 = vadd.f32 %v160, %v482
    %v484 = vpop.f32.mrf.mxu0
    %v485 = vadd.f32 %v156, %v484
    %v486 = vpop.f32.mrf.mxu0
    %v487 = vadd.f32 %v160, %v486
    %488 = vmatprep.mubr.bf16.mxu0 0
    %489 = vmatmul.mubr.bf16.gmra.mxu0 %v292
    %v490 = vpop.f32.mrf.mxu0
    %v491 = vadd.f32 %v156, %v490
    %v492 = vpop.f32.mrf.mxu0
    %v493 = vadd.f32 %v160, %v492
    %v494 = vpop.f32.mrf.mxu0
    %v495 = vadd.f32 %v156, %v494
    %v496 = vpop.f32.mrf.mxu0
    %v497 = vadd.f32 %v160, %v496
    %498 = vmatprep.mubr.bf16.mxu0 0
    %499 = vmatmul.mubr.bf16.gmra.mxu0 %v295
    %v500 = vpop.f32.mrf.mxu0
    %v501 = vadd.f32 %v156, %v500
    %v502 = vpop.f32.mrf.mxu0
    %v503 = vadd.f32 %v160, %v502
    %v504 = vpop.f32.mrf.mxu0
    %v505 = vadd.f32 %v156, %v504
    %v506 = vpop.f32.mrf.mxu0
    %v507 = vadd.f32 %v160, %v506
    %508 = vmatprep.mubr.bf16.mxu0 0
    %509 = vmatmul.mubr.bf16.gmra.mxu0 %v298
    %v510 = vpop.f32.mrf.mxu0
    %v511 = vadd.f32 %v156, %v510
    %v512 = vpop.f32.mrf.mxu0
    %v513 = vadd.f32 %v160, %v512
    %v514 = vpop.f32.mrf.mxu0
    %v515 = vadd.f32 %v156, %v514
    %v516 = vpop.f32.mrf.mxu0
    %v517 = vadd.f32 %v160, %v516
    %518 = vdwg.mxu0
    %v519 = vpack.c.bf16 %v339, %v335
    %v520 = vpack.c.bf16 %v341, %v337
    %v521 = vpack.c.bf16 %v412, %v408
    %v522 = vpack.c.bf16 %v414, %v410
    %v523 = vpack.c.bf16 %v485, %v481
    %v524 = vpack.c.bf16 %v487, %v483
    %v525 = vpack.c.bf16 %v349, %v345
    %v526 = vpack.c.bf16 %v351, %v347
    %v527 = vpack.c.bf16 %v422, %v418
    %v528 = vpack.c.bf16 %v424, %v420
    %v529 = vpack.c.bf16 %v495, %v491
    %v530 = vpack.c.bf16 %v497, %v493
    %v531 = vpack.c.bf16 %v359, %v355
    %v532 = vpack.c.bf16 %v361, %v357
    %v533 = vpack.c.bf16 %v432, %v428
    %v534 = vpack.c.bf16 %v434, %v430
    %v535 = vpack.c.bf16 %v505, %v501
    %v536 = vpack.c.bf16 %v507, %v503
    %v537 = vpack.c.bf16 %v369, %v365
    %v538 = vpack.c.bf16 %v371, %v367
    %v539 = vpack.c.bf16 %v442, %v438
    %v540 = vpack.c.bf16 %v444, %v440
    %v541 = vpack.c.bf16 %v515, %v511
    %v542 = vpack.c.bf16 %v517, %v513
    %v567 = vunpack.c.l.b16 %v519
    %v568 = vunpack.c.l.b16 %v520
    %v569 = vunpack.c.l.b16 %v521
    %v570 = vunpack.c.l.b16 %v522
    %v571 = vunpack.c.l.b16 %v523
    %v572 = vunpack.c.l.b16 %v524
    %v573 = vunpack.c.h.b16 %v519
    %v574 = vunpack.c.h.b16 %v520
    %v575 = vunpack.c.h.b16 %v521
    %v576 = vunpack.c.h.b16 %v522
    %v577 = vunpack.c.h.b16 %v523
    %v578 = vunpack.c.h.b16 %v524
    %v579 = vunpack.c.l.b16 %v525
    %v580 = vunpack.c.l.b16 %v526
    %v581 = vunpack.c.l.b16 %v527
    %v582 = vunpack.c.l.b16 %v528
    %v583 = vunpack.c.l.b16 %v529
    %v584 = vunpack.c.l.b16 %v530
    %v585 = vunpack.c.h.b16 %v525
    %v586 = vunpack.c.h.b16 %v526
    %v587 = vunpack.c.h.b16 %v527
    %v588 = vunpack.c.h.b16 %v528
    %v589 = vunpack.c.h.b16 %v529
    %v590 = vunpack.c.h.b16 %v530
    %v591 = vunpack.c.l.b16 %v531
    %v592 = vunpack.c.l.b16 %v532
    %v593 = vunpack.c.l.b16 %v533
    %v594 = vunpack.c.l.b16 %v534
    %v595 = vunpack.c.l.b16 %v535
    %v596 = vunpack.c.l.b16 %v536
    %v597 = vunpack.c.h.b16 %v531
    %v598 = vunpack.c.h.b16 %v532
    %v599 = vunpack.c.h.b16 %v533
    %v600 = vunpack.c.h.b16 %v534
    %v601 = vunpack.c.h.b16 %v535
    %v602 = vunpack.c.h.b16 %v536
    %v603 = vunpack.c.l.b16 %v537
    %v604 = vunpack.c.l.b16 %v538
    %v605 = vunpack.c.l.b16 %v539
    %v606 = vunpack.c.l.b16 %v540
    %v607 = vunpack.c.l.b16 %v541
    %v608 = vunpack.c.l.b16 %v542
    %v609 = vunpack.c.h.b16 %v537
    %v610 = vunpack.c.h.b16 %v538
    %v611 = vunpack.c.h.b16 %v539
    %v612 = vunpack.c.h.b16 %v540
    %v613 = vunpack.c.h.b16 %v541
    %v614 = vunpack.c.h.b16 %v542
    %v615 = vpack.c.b16 %v568, %v567
    %v616 = vpack.c.b16 %v570, %v569
    %v617 = vpack.c.b16 %v572, %v571
    %v618 = vpack.c.b16 %v574, %v573
    %v619 = vpack.c.b16 %v576, %v575
    %v620 = vpack.c.b16 %v578, %v577
    %v621 = vpack.c.b16 %v580, %v579
    %v622 = vpack.c.b16 %v582, %v581
    %v623 = vpack.c.b16 %v584, %v583
    %v624 = vpack.c.b16 %v586, %v585
    %v625 = vpack.c.b16 %v588, %v587
    %v626 = vpack.c.b16 %v590, %v589
    %v627 = vpack.c.b16 %v592, %v591
    %v628 = vpack.c.b16 %v594, %v593
    %v629 = vpack.c.b16 %v596, %v595
    %v630 = vpack.c.b16 %v598, %v597
    %v631 = vpack.c.b16 %v600, %v599
    %v632 = vpack.c.b16 %v602, %v601
    %v633 = vpack.c.b16 %v604, %v603
    %v634 = vpack.c.b16 %v606, %v605
    %v635 = vpack.c.b16 %v608, %v607
    %v636 = vpack.c.b16 %v610, %v609
    %v637 = vpack.c.b16 %v612, %v611
    %v638 = vpack.c.b16 %v614, %v613
    %663 = vst [vmem:[#allocation8] sm:$0xff] %v615
    %664 = vst [vmem:[#allocation8 + $0x8] sm:$0xff] %v616
    %665 = vst [vmem:[#allocation8 + $0x10] sm:$0xff] %v617
    %666 = vst [vmem:[#allocation8 + $0x18] sm:$0xff] %v618
    %667 = vst [vmem:[#allocation8 + $0x20] sm:$0xff] %v619
    %668 = vst [vmem:[#allocation8 + $0x28] sm:$0xff] %v620
    %669 = vst [vmem:[#allocation8 + $0x30] sm:$0xff] %v621
    %670 = vst [vmem:[#allocation8 + $0x38] sm:$0xff] %v622
    %671 = vst [vmem:[#allocation8 + $0x40] sm:$0xff] %v623
    %672 = vst [vmem:[#allocation8 + $0x48] sm:$0xff] %v624
    %673 = vst [vmem:[#allocation8 + $0x50] sm:$0xff] %v625
    %674 = vst [vmem:[#allocation8 + $0x58] sm:$0xff] %v626
    %675 = vst [vmem:[#allocation8 + $0x60] sm:$0xff] %v627
    %676 = vst [vmem:[#allocation8 + $0x68] sm:$0xff] %v628
    %677 = vst [vmem:[#allocation8 + $0x70] sm:$0xff] %v629
    %678 = vst [vmem:[#allocation8 + $0x78] sm:$0xff] %v630
    %679 = vst [vmem:[#allocation8 + $0x80] sm:$0xff] %v631
    %680 = vst [vmem:[#allocation8 + $0x88] sm:$0xff] %v632
    %681 = vst [vmem:[#allocation8 + $0x90] sm:$0xff] %v633
    %682 = vst [vmem:[#allocation8 + $0x98] sm:$0xff] %v634
    %683 = vst [vmem:[#allocation8 + $0xa0] sm:$0xff] %v635
    %684 = vst [vmem:[#allocation8 + $0xa8] sm:$0xff] %v636
    %685 = vst [vmem:[#allocation8 + $0xb0] sm:$0xff] %v637
    %686 = vst [vmem:[#allocation8 + $0xb8] sm:$0xff] %v638
    // Predicated region
    $region34: #{tpu_custom_call.1} parent=1 // pred_check
      _
    $region35: #{tpu_custom_call.1} parent=1 // pred_check_branch
      %688 = sbr.rel (0) target = $region37
    $region36: #{tpu_custom_call.1} parent=1 // pred_region
      %s690 = ssub.s32 3072, 3072
      %691 = vsyncadd [#allocation4], %s690
      %s692 = sshll.u32 [#allocation8], 4
      %s693 = int_to_ptr.vmem [resolvable:$true] %s692
      %698 = dma.vmem_to_hbm [thread:$0]  %s693, 3072, %s5, [#allocation4], 384, 384, 24
    $region37: #{tpu_custom_call.1} parent=1 // pred_fallthru
      _
    // Predicated region
    $region38: #{tpu_custom_call.1} parent=1 // pred_check
      _
    $region39: #{tpu_custom_call.1} parent=1 // pred_check_branch
      %700 = sbr.rel (0) target = $region41
    $region40: #{tpu_custom_call.1} parent=1 // pred_region
      %701 = dma.done [#allocation4], 3072
    $region41: #{tpu_custom_call.1} parent=1 // pred_fallthru
      _
    %702 = vsyncpa [#allocation3], 1
    %703 = vsyncpa [#allocation6], 1
    %704 = vsyncpa [#allocation4], 1

</llo_original>
